<compile_context>
chip_gen: v5e
topology: v5e:2x2
jax: 0.10.0
libtpu: 0.0.40
codegen_flags: <defaults>
</compile_context>

<pallas_src>
import functools
import math

import jax
import jax.numpy as jnp
from jax.experimental import pallas as pl
from jax.experimental.pallas import tpu as pltpu


_LANE = 128
_MIB = 1024 * 1024


def _round_up(x, m):
    return (x + m - 1) // m * m


def _vmem_limit_bytes():
    """Generation-aware VMEM limit (leaves headroom below physical VMEM)."""
    try:
        cap = int(pltpu.get_tpu_info().vmem_capacity_bytes)
    except Exception:  # unknown chip / API mismatch -> conservative (v7x)
        cap = 64 * _MIB
    # ~108 MiB on 128 MiB chips (v5e/v6e), ~52 MiB on 64 MiB chips (v7x).
    return max(32 * _MIB, min(int(0.85 * cap), cap - 12 * _MIB))


def _choose_tile(dim, cap, gran):
    """Tile size (multiple of `gran`, <= cap) and padded dim.

    Minimizes the padded dim; among ties prefers the larger tile, so dims that
    are multiples of 256/512 get big tiles instead of collapsing to `gran`.
    """
    dim_g = _round_up(max(dim, 1), gran)
    cap = min(cap, dim_g)
    cap = max(gran, cap - cap % gran)
    best_t, best_pad = gran, _round_up(dim_g, gran)
    t = cap
    while t >= gran:
        padded = _round_up(dim_g, t)
        if padded < best_pad or (padded == best_pad and t > best_t):
            best_t, best_pad = t, padded
        t -= gran
    return best_t, best_pad


def _maybe_cast(v, dtype):
    return v if dtype is None else v.astype(dtype)


# ---------------------------------------------------------------------------
# Fused whole-MLP kernel: grid over batch tiles only; all layers in the body.
# Intermediate activations stay on-chip (vregs/VMEM), never touch HBM.
# ---------------------------------------------------------------------------
def _make_fused_mlp_kernel(n_layers, compute_dtype):
    def kernel(x_ref, *refs):
        o_ref = refs[-1]
        act = x_ref[...]
        for l in range(n_layers):
            w = refs[2 * l][...]              # (d_in_p, d_out_p)
            b = refs[2 * l + 1][...]          # (1, d_out_p) float32
            acc = jnp.dot(_maybe_cast(act, compute_dtype), w,
                          preferred_element_type=jnp.float32)
            act = jnp.maximum(acc + b, 0.0)   # f32 bias add + ReLU epilogue
        o_ref[...] = act.astype(o_ref.dtype)
    return kernel


def _fused_mlp(x_p, padded_params, *, bm, out_dtype, compute_dtype,
               vmem_limit):
    B_p, d0_p = x_p.shape
    n_layers = len(padded_params)
    dims_p = [d0_p] + [w.shape[1] for (w, _) in padded_params]

    operands = [x_p]
    for (w_p, b_p) in padded_params:
        operands += [w_p, b_p]

    flops = sum(2 * B_p * dims_p[l] * dims_p[l + 1] for l in range(n_layers))
    bytes_accessed = int(x_p.nbytes) + sum(int(w.nbytes) + int(b.nbytes)
                                           for (w, b) in padded_params)
    bytes_accessed += B_p * dims_p[-1] * jnp.dtype(out_dtype).itemsize

    def build(single_buffer_consts):
        in_specs = [pl.BlockSpec((bm, d0_p), lambda i: (i, 0))]
        for (w_p, b_p) in padded_params:
            if single_buffer_consts:
                # Constant across the batch grid -> no point double-buffering.
                in_specs.append(pl.BlockSpec(w_p.shape, lambda i: (0, 0),
                                             pipeline_mode=pl.Buffered(1)))
                in_specs.append(pl.BlockSpec(b_p.shape, lambda i: (0, 0),
                                             pipeline_mode=pl.Buffered(1)))
            else:
                in_specs.append(pl.BlockSpec(w_p.shape, lambda i: (0, 0)))
                in_specs.append(pl.BlockSpec(b_p.shape, lambda i: (0, 0)))
        return pl.pallas_call(
            _make_fused_mlp_kernel(n_layers, compute_dtype),
            out_shape=jax.ShapeDtypeStruct((B_p, dims_p[-1]), out_dtype),
            grid=(B_p // bm,),
            in_specs=in_specs,
            out_specs=pl.BlockSpec((bm, dims_p[-1]), lambda i: (i, 0)),
            compiler_params=pltpu.CompilerParams(
                dimension_semantics=("parallel",),
                vmem_limit_bytes=vmem_limit),
            cost_estimate=pl.CostEstimate(flops=flops, transcendentals=0,
                                          bytes_accessed=bytes_accessed),
        )

    try:
        return build(True)(*operands)
    except Exception:
        # pipeline_mode=pl.Buffered(1) unsupported on this jax -> retry with
        # default (double-buffered) specs; any genuine error re-raises here.
        return build(False)(*operands)


# ---------------------------------------------------------------------------
# Fallback: per-layer tiled matmul with f32 accumulator (for large dims that
# do not fit whole in VMEM, e.g. 4096x4096 weights on v7x).
# ---------------------------------------------------------------------------
def _linear_relu_tiled_kernel(x_ref, w_ref, b_ref, o_ref, acc_ref, *,
                              compute_dtype):
    k = pl.program_id(2)

    @pl.when(k == 0)
    def _():
        acc_ref[...] = jnp.zeros_like(acc_ref)

    acc_ref[...] += jnp.dot(_maybe_cast(x_ref[...], compute_dtype), w_ref[...],
                            preferred_element_type=jnp.float32)

    @pl.when(k == pl.num_programs(2) - 1)
    def _():
        o_ref[...] = jnp.maximum(acc_ref[...] + b_ref[...],
                                 0.0).astype(o_ref.dtype)


def _linear_relu_tiled(x_p, w_p, b_p, *, bm, bn_cap=512, bk_cap=1024,
                       out_dtype, compute_dtype, vmem_limit):
    B_p, K_p = x_p.shape
    _, N_p = w_p.shape

    bn, N_pp = _choose_tile(N_p, bn_cap, _LANE)
    bk, K_pp = _choose_tile(K_p, bk_cap, _LANE)

    # Zero-pad K/N up to tile multiples (exact: zero cols/rows contribute 0).
    if K_pp > K_p:
        x_p = jnp.pad(x_p, ((0, 0), (0, K_pp - K_p)))
        w_p = jnp.pad(w_p, ((0, K_pp - K_p), (0, 0)))
    if N_pp > N_p:
        w_p = jnp.pad(w_p, ((0, 0), (0, N_pp - N_p)))
        b_p = jnp.pad(b_p, ((0, 0), (0, N_pp - N_p)))

    grid = (B_p // bm, N_pp // bn, K_pp // bk)

    flops = 2 * B_p * K_pp * N_pp
    bytes_accessed = (int(x_p.nbytes) + int(w_p.nbytes) + int(b_p.nbytes)
                      + B_p * N_pp * jnp.dtype(out_dtype).itemsize)

    kernel = functools.partial(_linear_relu_tiled_kernel,
                               compute_dtype=compute_dtype)
    out = pl.pallas_call(
        kernel,
        out_shape=jax.ShapeDtypeStruct((B_p, N_pp), out_dtype),
        grid=grid,
        in_specs=[
            pl.BlockSpec((bm, bk), lambda i, j, k: (i, k)),
            pl.BlockSpec((bk, bn), lambda i, j, k: (k, j)),
            pl.BlockSpec((1, bn), lambda i, j, k: (0, j)),
        ],
        out_specs=pl.BlockSpec((bm, bn), lambda i, j, k: (i, j)),
        scratch_shapes=[pltpu.VMEM((bm, bn), jnp.float32)],
        compiler_params=pltpu.CompilerParams(
            dimension_semantics=("parallel", "parallel", "arbitrary"),
            vmem_limit_bytes=vmem_limit),
        cost_estimate=pl.CostEstimate(flops=flops, transcendentals=0,
                                      bytes_accessed=bytes_accessed),
    )(x_p, w_p, b_p)
    return out[:, :N_p] if N_pp > N_p else out


# ---------------------------------------------------------------------------
# Parameter setup / forward
# ---------------------------------------------------------------------------
def init_fc_generator_params(key, input_size, output_size, hidden_dims,
                             dtype=jnp.float32):
    """nn.Linear-style init (uniform +-1/sqrt(fan_in)); W stored (in, out)."""
    dims = [input_size] + list(hidden_dims) + [output_size]
    params = []
    for i in range(len(dims) - 1):
        d_in, d_out = dims[i], dims[i + 1]
        key, kw, kb = jax.random.split(key, 3)
        bound = 1.0 / math.sqrt(d_in)
        w = jax.random.uniform(kw, (d_in, d_out), dtype, -bound, bound)
        b = jax.random.uniform(kb, (d_out,), dtype, -bound, bound)
        params.append((w, b))
    return params


def _pad_params(params):
    """Zero-pad feature dims up to multiples of 128 (lane-dense).

    Zero padding is exact: padded input cols hit zero weight rows, padded
    output cols get bias 0 -> relu(0) = 0, which feeds zeros onward.
    """
    padded = []
    for (w, b) in params:
        d_in, d_out = w.shape
        d_in_p, d_out_p = _round_up(d_in, _LANE), _round_up(d_out, _LANE)
        w_p = jnp.pad(w, ((0, d_in_p - d_in), (0, d_out_p - d_out)))
        b_p = jnp.pad(b, (0, d_out_p - d_out)).reshape(1, d_out_p)
        padded.append((w_p, b_p))
    return padded


def fc_generator_forward(params, x, *, block_m=256,
                         compute_dtype=jnp.bfloat16, force_tiled=False):
    """Forward pass: every layer (including the last) is Linear then ReLU.

    compute_dtype=jnp.bfloat16 (default): bf16 MXU operands, f32 accumulate
    and f32 bias/ReLU epilogue.  compute_dtype=None: pure f32 path.
    """
    B, d_in = x.shape
    d_out = params[-1][0].shape[1]
    out_dtype = x.dtype

    padded = _pad_params(params)
    dims_p = [padded[0][0].shape[0]] + [w.shape[1] for (w, _) in padded]

    # Batch tile: sublane-multiple only (8 for f32, 16 for bf16), capped at
    # block_m (256-aligned for v6e/v7x MXU when the batch allows it).
    if compute_dtype is None:
        sublane = 8
    else:
        sublane = 16 if jnp.dtype(compute_dtype).itemsize == 2 else 8
    bm, B_p = _choose_tile(B, block_m, sublane)

    x_p = jnp.pad(x, ((0, B_p - B), (0, dims_p[0] - d_in)))
    if compute_dtype is not None:
        # bf16 matmul path: halves weight DMA + VMEM; f32 accumulate.
        x_p = x_p.astype(compute_dtype)
        padded = [(w.astype(compute_dtype), b) for (w, b) in padded]

    vmem_limit = _vmem_limit_bytes()
    vmem_budget = (3 * vmem_limit) // 4

    # Fused-kernel VMEM footprint estimate: double-buffered input/output
    # blocks, single-buffered weights/biases, f32 intermediate activations,
    # the f32 matmul result temporary, and Mosaic internal-scratch headroom.
    in_item = x_p.dtype.itemsize
    out_item = jnp.dtype(out_dtype).itemsize
    fused_bytes = 2 * bm * dims_p[0] * in_item
    fused_bytes += sum(int(w.nbytes) + int(b.nbytes) for (w, b) in padded)
    fused_bytes += 2 * bm * dims_p[-1] * out_item
    fused_bytes += sum(bm * d * 4 for d in dims_p[1:])
    fused_bytes += bm * max(dims_p) * 4
    fused_bytes += 2 * _MIB

    if not force_tiled and fused_bytes <= vmem_budget:
        out_p = _fused_mlp(x_p, padded, bm=bm, out_dtype=out_dtype,
                           compute_dtype=compute_dtype,
                           vmem_limit=vmem_limit)
    else:
        # Large-dim fallback: per-layer tiled matmul (weights streamed by K/N
        # tile, never fully resident); activations cross HBM between layers in
        # compute_dtype (bf16 by default) to halve that traffic.
        out_p = x_p
        for li, (w_p, b_p) in enumerate(padded):
            last = li == len(padded) - 1
            layer_out_dtype = out_dtype if last else x_p.dtype
            out_p = _linear_relu_tiled(out_p, w_p, b_p, bm=bm,
                                       out_dtype=layer_out_dtype,
                                       compute_dtype=compute_dtype,
                                       vmem_limit=vmem_limit)

    return out_p[:B, :d_out]


def fc_generator_reference(params, x):
    out = x
    for (w, b) in params:
        out = jnp.maximum(out @ w + b[None, :], 0.0)
    return out


if __name__ == "__main__":
    key = jax.random.PRNGKey(0)
    k_param, k_x = jax.random.split(key)

    batch = 8
    input_size = 32
    hidden_dims = [64, 48]
    output_size = 16

    params = init_fc_generator_params(k_param, input_size, output_size,
                                      hidden_dims)
    x = jax.random.normal(k_x, (batch, input_size), dtype=jnp.float32)

    ref = fc_generator_reference(params, x)

    # 1) Default path: fused single-kernel, bf16 operands / f32 accumulate.
    out_bf16 = jax.block_until_ready(fc_generator_forward(params, x))
    assert out_bf16.shape == (batch, output_size)
    assert jnp.allclose(out_bf16, ref, atol=3e-2, rtol=3e-2)

    # 2) Pure-f32 fused path (tight tolerance).
    out_f32 = jax.block_until_ready(
        fc_generator_forward(params, x, compute_dtype=None))
    assert out_f32.shape == (batch, output_size)
    assert jnp.allclose(out_f32, ref, atol=1e-5, rtol=1e-5)

    # 3) Tiled fallback path, f32 (used for hidden dims too large for VMEM).
    out_tiled = jax.block_until_ready(
        fc_generator_forward(params, x, force_tiled=True, compute_dtype=None))
    assert out_tiled.shape == (batch, output_size)
    assert jnp.allclose(out_tiled, ref, atol=1e-5, rtol=1e-5)

    # 4) Tiled fallback path, bf16 operands.
    out_tiled_bf16 = jax.block_until_ready(
        fc_generator_forward(params, x, force_tiled=True))
    assert out_tiled_bf16.shape == (batch, output_size)
    assert jnp.allclose(out_tiled_bf16, ref, atol=3e-2, rtol=3e-2)

    print("KERNEL_OK")
</pallas_src>

<mosaic_0001>
module attributes {stable_mosaic.version = 11 : i64} {
  func.func @kernel(%arg0: i32, %arg1: memref<16x128xbf16, #tpu.memory_space<vmem>>, %arg2: memref<128x128xbf16, #tpu.memory_space<vmem>>, %arg3: memref<1x128xf32, #tpu.memory_space<vmem>>, %arg4: memref<128x128xbf16, #tpu.memory_space<vmem>>, %arg5: memref<1x128xf32, #tpu.memory_space<vmem>>, %arg6: memref<128x128xbf16, #tpu.memory_space<vmem>>, %arg7: memref<1x128xf32, #tpu.memory_space<vmem>>, %arg8: memref<16x128xf32, #tpu.memory_space<vmem>>) attributes {dimension_semantics = [#tpu.dimension_semantics<parallel>], iteration_bounds = array<i64: 1>, scalar_prefetch = 0 : i64, scratch_operands = 0 : i64, tpu.core_type = #tpu.core_type<tc>, window_params = [{transform_indices = @transform_0, window_bounds = array<i64: 16, 128>}, {pipeline_mode = #tpu.pipeline_mode<synchronous>, transform_indices = @transform_1, window_bounds = array<i64: 128, 128>}, {pipeline_mode = #tpu.pipeline_mode<synchronous>, transform_indices = @transform_2, window_bounds = array<i64: 1, 128>}, {pipeline_mode = #tpu.pipeline_mode<synchronous>, transform_indices = @transform_3, window_bounds = array<i64: 128, 128>}, {pipeline_mode = #tpu.pipeline_mode<synchronous>, transform_indices = @transform_4, window_bounds = array<i64: 1, 128>}, {pipeline_mode = #tpu.pipeline_mode<synchronous>, transform_indices = @transform_5, window_bounds = array<i64: 128, 128>}, {pipeline_mode = #tpu.pipeline_mode<synchronous>, transform_indices = @transform_6, window_bounds = array<i64: 1, 128>}, {transform_indices = @transform_7, window_bounds = array<i64: 16, 128>}]} {
    %c0 = arith.constant 0 : index
    %c0_0 = arith.constant 0 : index
    %0 = vector.load %arg1[%c0, %c0_0] : memref<16x128xbf16, #tpu.memory_space<vmem>>, vector<16x128xbf16>
    %c0_1 = arith.constant 0 : index
    %c0_2 = arith.constant 0 : index
    %1 = vector.load %arg2[%c0_1, %c0_2] : memref<128x128xbf16, #tpu.memory_space<vmem>>, vector<128x128xbf16>
    %c0_3 = arith.constant 0 : index
    %c0_4 = arith.constant 0 : index
    %2 = vector.load %arg3[%c0_3, %c0_4] : memref<1x128xf32, #tpu.memory_space<vmem>>, vector<1x128xf32>
    %cst = arith.constant dense<0.000000e+00> : vector<16x128xf32>
    %3 = tpu.matmul %0, %1, %cst {dimension_numbers = #tpu.dot_dimension_numbers<[1], [0], [0], [1], [0, 0, 1, 1], [], []>} : vector<16x128xbf16>, vector<128x128xbf16>, vector<16x128xf32> -> vector<16x128xf32>
    %4 = vector.broadcast %2 : vector<1x128xf32> to vector<16x128xf32>
    %5 = arith.addf %3, %4 : vector<16x128xf32>
    %cst_5 = arith.constant 0.000000e+00 : f32
    %6 = vector.broadcast %cst_5 : f32 to vector<16x128xf32>
    %7 = arith.maximumf %5, %6 : vector<16x128xf32>
    %c0_6 = arith.constant 0 : index
    %c0_7 = arith.constant 0 : index
    %8 = vector.load %arg4[%c0_6, %c0_7] : memref<128x128xbf16, #tpu.memory_space<vmem>>, vector<128x128xbf16>
    %c0_8 = arith.constant 0 : index
    %c0_9 = arith.constant 0 : index
    %9 = vector.load %arg5[%c0_8, %c0_9] : memref<1x128xf32, #tpu.memory_space<vmem>>, vector<1x128xf32>
    %10 = arith.truncf %7 : vector<16x128xf32> to vector<16x128xbf16>
    %cst_10 = arith.constant dense<0.000000e+00> : vector<16x128xf32>
    %11 = tpu.matmul %10, %8, %cst_10 {dimension_numbers = #tpu.dot_dimension_numbers<[1], [0], [0], [1], [0, 0, 1, 1], [], []>} : vector<16x128xbf16>, vector<128x128xbf16>, vector<16x128xf32> -> vector<16x128xf32>
    %12 = vector.broadcast %9 : vector<1x128xf32> to vector<16x128xf32>
    %13 = arith.addf %11, %12 : vector<16x128xf32>
    %cst_11 = arith.constant 0.000000e+00 : f32
    %14 = vector.broadcast %cst_11 : f32 to vector<16x128xf32>
    %15 = arith.maximumf %13, %14 : vector<16x128xf32>
    %c0_12 = arith.constant 0 : index
    %c0_13 = arith.constant 0 : index
    %16 = vector.load %arg6[%c0_12, %c0_13] : memref<128x128xbf16, #tpu.memory_space<vmem>>, vector<128x128xbf16>
    %c0_14 = arith.constant 0 : index
    %c0_15 = arith.constant 0 : index
    %17 = vector.load %arg7[%c0_14, %c0_15] : memref<1x128xf32, #tpu.memory_space<vmem>>, vector<1x128xf32>
    %18 = arith.truncf %15 : vector<16x128xf32> to vector<16x128xbf16>
    %cst_16 = arith.constant dense<0.000000e+00> : vector<16x128xf32>
    %19 = tpu.matmul %18, %16, %cst_16 {dimension_numbers = #tpu.dot_dimension_numbers<[1], [0], [0], [1], [0, 0, 1, 1], [], []>} : vector<16x128xbf16>, vector<128x128xbf16>, vector<16x128xf32> -> vector<16x128xf32>
    %20 = vector.broadcast %17 : vector<1x128xf32> to vector<16x128xf32>
    %21 = arith.addf %19, %20 : vector<16x128xf32>
    %cst_17 = arith.constant 0.000000e+00 : f32
    %22 = vector.broadcast %cst_17 : f32 to vector<16x128xf32>
    %23 = arith.maximumf %21, %22 : vector<16x128xf32>
    %c0_18 = arith.constant 0 : index
    %c0_19 = arith.constant 0 : index
    %24 = vector.load %arg8[%c0_18, %c0_19] : memref<16x128xf32, #tpu.memory_space<vmem>>, vector<16x128xf32>
    tpu.vector_store %arg8[%c0_18, %c0_19], %23 {strides = array<i32>} : memref<16x128xf32, #tpu.memory_space<vmem>>, vector<16x128xf32>,
    return
  }
  func.func @transform_0(%arg0: i32) -> (i32, i32) {
    %c0_i32 = arith.constant 0 : i32
    %c0_i32_0 = arith.constant 0 : i32
    return %arg0, %c0_i32 : i32, i32
  }
  func.func @transform_1(%arg0: i32) -> (i32, i32) {
    %c0_i32 = arith.constant 0 : i32
    %c0_i32_0 = arith.constant 0 : i32
    %c0_i32_1 = arith.constant 0 : i32
    return %c0_i32, %c0_i32_0 : i32, i32
  }
  func.func @transform_2(%arg0: i32) -> (i32, i32) {
    %c0_i32 = arith.constant 0 : i32
    %c0_i32_0 = arith.constant 0 : i32
    %c0_i32_1 = arith.constant 0 : i32
    return %c0_i32, %c0_i32_0 : i32, i32
  }
  func.func @transform_3(%arg0: i32) -> (i32, i32) {
    %c0_i32 = arith.constant 0 : i32
    %c0_i32_0 = arith.constant 0 : i32
    %c0_i32_1 = arith.constant 0 : i32
    return %c0_i32, %c0_i32_0 : i32, i32
  }
  func.func @transform_4(%arg0: i32) -> (i32, i32) {
    %c0_i32 = arith.constant 0 : i32
    %c0_i32_0 = arith.constant 0 : i32
    %c0_i32_1 = arith.constant 0 : i32
    return %c0_i32, %c0_i32_0 : i32, i32
  }
  func.func @transform_5(%arg0: i32) -> (i32, i32) {
    %c0_i32 = arith.constant 0 : i32
    %c0_i32_0 = arith.constant 0 : i32
    %c0_i32_1 = arith.constant 0 : i32
    return %c0_i32, %c0_i32_0 : i32, i32
  }
  func.func @transform_6(%arg0: i32) -> (i32, i32) {
    %c0_i32 = arith.constant 0 : i32
    %c0_i32_0 = arith.constant 0 : i32
    %c0_i32_1 = arith.constant 0 : i32
    return %c0_i32, %c0_i32_0 : i32, i32
  }
  func.func @transform_7(%arg0: i32) -> (i32, i32) {
    %c0_i32 = arith.constant 0 : i32
    %c0_i32_0 = arith.constant 0 : i32
    return %arg0, %c0_i32 : i32, i32
  }
}

module attributes {stable_mosaic.version = 11 : i64} {
  func.func @kernel(%arg0: i32, %arg1: memref<16x128xbf16, #tpu.memory_space<vmem>>, %arg2: memref<128x128xbf16, #tpu.memory_space<vmem>>, %arg3: memref<1x128xf32, #tpu.memory_space<vmem>>, %arg4: memref<128x128xbf16, #tpu.memory_space<vmem>>, %arg5: memref<1x128xf32, #tpu.memory_space<vmem>>, %arg6: memref<128x128xbf16, #tpu.memory_space<vmem>>, %arg7: memref<1x128xf32, #tpu.memory_space<vmem>>, %arg8: memref<16x128xf32, #tpu.memory_space<vmem>>) attributes {dimension_semantics = [#tpu.dimension_semantics<parallel>], iteration_bounds = array<i64: 1>, scalar_prefetch = 0 : i64, scratch_operands = 0 : i64, tpu.core_type = #tpu.core_type<tc>, window_params = [{transform_indices = @transform_0, window_bounds = array<i64: 16, 128>}, {pipeline_mode = #tpu.pipeline_mode<synchronous>, transform_indices = @transform_1, window_bounds = array<i64: 128, 128>}, {pipeline_mode = #tpu.pipeline_mode<synchronous>, transform_indices = @transform_2, window_bounds = array<i64: 1, 128>}, {pipeline_mode = #tpu.pipeline_mode<synchronous>, transform_indices = @transform_3, window_bounds = array<i64: 128, 128>}, {pipeline_mode = #tpu.pipeline_mode<synchronous>, transform_indices = @transform_4, window_bounds = array<i64: 1, 128>}, {pipeline_mode = #tpu.pipeline_mode<synchronous>, transform_indices = @transform_5, window_bounds = array<i64: 128, 128>}, {pipeline_mode = #tpu.pipeline_mode<synchronous>, transform_indices = @transform_6, window_bounds = array<i64: 1, 128>}, {transform_indices = @transform_7, window_bounds = array<i64: 16, 128>}]} {
    %c0 = arith.constant 0 : index
    %c0_0 = arith.constant 0 : index
    %0 = vector.load %arg1[%c0, %c0_0] : memref<16x128xbf16, #tpu.memory_space<vmem>>, vector<16x128xbf16>
    %c0_1 = arith.constant 0 : index
    %c0_2 = arith.constant 0 : index
    %1 = vector.load %arg2[%c0_1, %c0_2] : memref<128x128xbf16, #tpu.memory_space<vmem>>, vector<128x128xbf16>
    %c0_3 = arith.constant 0 : index
    %c0_4 = arith.constant 0 : index
    %2 = vector.load %arg3[%c0_3, %c0_4] : memref<1x128xf32, #tpu.memory_space<vmem>>, vector<1x128xf32>
    %cst = arith.constant dense<0.000000e+00> : vector<16x128xf32>
    %3 = tpu.matmul %0, %1, %cst {dimension_numbers = #tpu.dot_dimension_numbers<[1], [0], [0], [1], [0, 0, 1, 1], [], []>} : vector<16x128xbf16>, vector<128x128xbf16>, vector<16x128xf32> -> vector<16x128xf32>
    %4 = vector.broadcast %2 : vector<1x128xf32> to vector<16x128xf32>
    %5 = arith.addf %3, %4 : vector<16x128xf32>
    %cst_5 = arith.constant 0.000000e+00 : f32
    %6 = vector.broadcast %cst_5 : f32 to vector<16x128xf32>
    %7 = arith.maximumf %5, %6 : vector<16x128xf32>
    %c0_6 = arith.constant 0 : index
    %c0_7 = arith.constant 0 : index
    %8 = vector.load %arg4[%c0_6, %c0_7] : memref<128x128xbf16, #tpu.memory_space<vmem>>, vector<128x128xbf16>
    %c0_8 = arith.constant 0 : index
    %c0_9 = arith.constant 0 : index
    %9 = vector.load %arg5[%c0_8, %c0_9] : memref<1x128xf32, #tpu.memory_space<vmem>>, vector<1x128xf32>
    %10 = arith.truncf %7 : vector<16x128xf32> to vector<16x128xbf16>
    %cst_10 = arith.constant dense<0.000000e+00> : vector<16x128xf32>
    %11 = tpu.matmul %10, %8, %cst_10 {dimension_numbers = #tpu.dot_dimension_numbers<[1], [0], [0], [1], [0, 0, 1, 1], [], []>} : vector<16x128xbf16>, vector<128x128xbf16>, vector<16x128xf32> -> vector<16x128xf32>
    %12 = vector.broadcast %9 : vector<1x128xf32> to vector<16x128xf32>
    %13 = arith.addf %11, %12 : vector<16x128xf32>
    %cst_11 = arith.constant 0.000000e+00 : f32
    %14 = vector.broadcast %cst_11 : f32 to vector<16x128xf32>
    %15 = arith.maximumf %13, %14 : vector<16x128xf32>
    %c0_12 = arith.constant 0 : index
    %c0_13 = arith.constant 0 : index
    %16 = vector.load %arg6[%c0_12, %c0_13] : memref<128x128xbf16, #tpu.memory_space<vmem>>, vector<128x128xbf16>
    %c0_14 = arith.constant 0 : index
    %c0_15 = arith.constant 0 : index
    %17 = vector.load %arg7[%c0_14, %c0_15] : memref<1x128xf32, #tpu.memory_space<vmem>>, vector<1x128xf32>
    %18 = arith.truncf %15 : vector<16x128xf32> to vector<16x128xbf16>
    %cst_16 = arith.constant dense<0.000000e+00> : vector<16x128xf32>
    %19 = tpu.matmul %18, %16, %cst_16 {dimension_numbers = #tpu.dot_dimension_numbers<[1], [0], [0], [1], [0, 0, 1, 1], [], []>} : vector<16x128xbf16>, vector<128x128xbf16>, vector<16x128xf32> -> vector<16x128xf32>
    %20 = vector.broadcast %17 : vector<1x128xf32> to vector<16x128xf32>
    %21 = arith.addf %19, %20 : vector<16x128xf32>
    %cst_17 = arith.constant 0.000000e+00 : f32
    %22 = vector.broadcast %cst_17 : f32 to vector<16x128xf32>
    %23 = arith.maximumf %21, %22 : vector<16x128xf32>
    %c0_18 = arith.constant 0 : index
    %c0_19 = arith.constant 0 : index
    %24 = vector.load %arg8[%c0_18, %c0_19] : memref<16x128xf32, #tpu.memory_space<vmem>>, vector<16x128xf32>
    tpu.vector_store %arg8[%c0_18, %c0_19], %23 {strides = array<i32>} : memref<16x128xf32, #tpu.memory_space<vmem>>, vector<16x128xf32>,
    return
  }
  func.func @transform_0(%arg0: i32) -> (i32, i32) {
    %c0_i32 = arith.constant 0 : i32
    %c0_i32_0 = arith.constant 0 : i32
    return %arg0, %c0_i32 : i32, i32
  }
  func.func @transform_1(%arg0: i32) -> (i32, i32) {
    %c0_i32 = arith.constant 0 : i32
    %c0_i32_0 = arith.constant 0 : i32
    %c0_i32_1 = arith.constant 0 : i32
    return %c0_i32, %c0_i32_0 : i32, i32
  }
  func.func @transform_2(%arg0: i32) -> (i32, i32) {
    %c0_i32 = arith.constant 0 : i32
    %c0_i32_0 = arith.constant 0 : i32
    %c0_i32_1 = arith.constant 0 : i32
    return %c0_i32, %c0_i32_0 : i32, i32
  }
  func.func @transform_3(%arg0: i32) -> (i32, i32) {
    %c0_i32 = arith.constant 0 : i32
    %c0_i32_0 = arith.constant 0 : i32
    %c0_i32_1 = arith.constant 0 : i32
    return %c0_i32, %c0_i32_0 : i32, i32
  }
  func.func @transform_4(%arg0: i32) -> (i32, i32) {
    %c0_i32 = arith.constant 0 : i32
    %c0_i32_0 = arith.constant 0 : i32
    %c0_i32_1 = arith.constant 0 : i32
    return %c0_i32, %c0_i32_0 : i32, i32
  }
  func.func @transform_5(%arg0: i32) -> (i32, i32) {
    %c0_i32 = arith.constant 0 : i32
    %c0_i32_0 = arith.constant 0 : i32
    %c0_i32_1 = arith.constant 0 : i32
    return %c0_i32, %c0_i32_0 : i32, i32
  }
  func.func @transform_6(%arg0: i32) -> (i32, i32) {
    %c0_i32 = arith.constant 0 : i32
    %c0_i32_0 = arith.constant 0 : i32
    %c0_i32_1 = arith.constant 0 : i32
    return %c0_i32, %c0_i32_0 : i32, i32
  }
  func.func @transform_7(%arg0: i32) -> (i32, i32) {
    %c0_i32 = arith.constant 0 : i32
    %c0_i32_0 = arith.constant 0 : i32
    return %arg0, %c0_i32 : i32, i32
  }
}

</mosaic_0001>

<llo_original>
// kernel: tpu_custom_call.1
$region0: #{tpu_custom_call.1}
  #allocation0 [shape = 'u32[]', space=smem, size = 0x4, offset = 0x4, fixed_abs, tag = 'smem constant byte address 0x4 - core index']
  #allocation1 [shape = 'u32[72,128]{1,0:T(1,128)}', space=vmem, size = 0x9000, scoped, tag = 'internal scratch']
  %s0 = inlined_call_operand.hbm [shape: bf16[16,128], index: 0, kind: input, shape index: {}]
  %s1 = inlined_call_operand.hbm [shape: bf16[128,128], index: 1, kind: input, shape index: {}]
  %s2 = inlined_call_operand.vmem [shape: f32[1,128], index: 2, kind: input, shape index: {}]
  %s3 = inlined_call_operand.hbm [shape: bf16[128,128], index: 3, kind: input, shape index: {}]
  %s4 = inlined_call_operand.vmem [shape: f32[1,128], index: 4, kind: input, shape index: {}]
  %s5 = inlined_call_operand.hbm [shape: bf16[128,128], index: 5, kind: input, shape index: {}]
  %s6 = inlined_call_operand.vmem [shape: f32[1,128], index: 6, kind: input, shape index: {}]
  %s7 = inlined_call_operand.hbm [shape: f32[16,128], index: 7, kind: output, shape index: {}]
  %s8 = sld [smem:[#allocation0]]
  $region54: #{tpu_custom_call.1} parent=0
    _
  %s10 = ssub.s32 1, %s8
  %s11 = scalar_select 0, %s10, %s8
  $region1: #{tpu_custom_call.1} parent=0
    #allocation2 [shape = 'u8[4096]{0}', space=vmem, size = 0x1000, scoped, tag = 'input window, operand 0, single buffered']
    #allocation3 [shape = 's32[1]{0}', space=sflag, size = 0x4, scoped, tag = 'scoped memory for tpu_custom_call.1']
    #allocation4 [shape = 's32[1]{0}', space=sflag, size = 0x4, scoped, tag = 'scoped memory for tpu_custom_call.1']
    #allocation5 [shape = 'u8[32768]{0}', space=vmem, size = 0x8000, scoped, tag = 'input window, operand 1, single buffered']
    #allocation6 [shape = 's32[1]{0}', space=sflag, size = 0x4, scoped, tag = 'scoped memory for tpu_custom_call.1']
    #allocation7 [shape = 'u8[32768]{0}', space=vmem, size = 0x8000, scoped, tag = 'input window, operand 3, single buffered']
    #allocation8 [shape = 'u8[32768]{0}', space=vmem, size = 0x8000, scoped, tag = 'input window, operand 5, single buffered']
    #allocation9 [shape = 's32[1]{0}', space=sflag, size = 0x4, scoped, tag = 'scoped memory for tpu_custom_call.1']
    #allocation10 [shape = 'u8[8192]{0}', space=vmem, size = 0x2000, scoped, tag = 'output window, operand 0, single buffered']
    %12 = vsyncpa [#allocation3], 0
    %13 = vsyncpa [#allocation6], 0
    %14 = vsyncpa [#allocation9], 0
    %15 = vsyncpa [#allocation4], 0
    // Predicated region
    $region2: #{tpu_custom_call.1} parent=1 // pred_check
      _
    $region3: #{tpu_custom_call.1} parent=1 // pred_check_branch
      %17 = sbr.rel (0) target = $region5
    $region4: #{tpu_custom_call.1} parent=1 // pred_region
      %19 = vsyncadd [#allocation3], 0
      %s20 = sshll.u32 %s0, 4
      %s21 = int_to_ptr.hbm [resolvable:$true] %s20
      %s22 = sshll.u32 [#allocation2], 4
      %s23 = int_to_ptr.vmem [resolvable:$true] %s22
      %28 = dma.hbm_to_vmem [thread:$0]  %s21, 128, %s23, [#allocation3], 64, 64, 4
    $region5: #{tpu_custom_call.1} parent=1 // pred_fallthru
      _
    // Predicated region
    $region6: #{tpu_custom_call.1} parent=1 // pred_check
      _
    $region7: #{tpu_custom_call.1} parent=1 // pred_check_branch
      %30 = sbr.rel (0) target = $region9
    $region8: #{tpu_custom_call.1} parent=1 // pred_region
      %32 = vsyncadd [#allocation6], 0
      %s33 = sshll.u32 %s1, 4
      %s34 = int_to_ptr.hbm [resolvable:$true] %s33
      %s35 = sshll.u32 [#allocation5], 4
      %s36 = int_to_ptr.vmem [resolvable:$true] %s35
      %41 = dma.hbm_to_vmem [thread:$0]  %s34, 1024, %s36, [#allocation6], 64, 64, 4
    $region9: #{tpu_custom_call.1} parent=1 // pred_fallthru
      _
    // Predicated region
    $region10: #{tpu_custom_call.1} parent=1 // pred_check
      _
    $region11: #{tpu_custom_call.1} parent=1 // pred_check_branch
      %43 = sbr.rel (0) target = $region13
    $region12: #{tpu_custom_call.1} parent=1 // pred_region
      _
    $region13: #{tpu_custom_call.1} parent=1 // pred_fallthru
      _
    // Predicated region
    $region14: #{tpu_custom_call.1} parent=1 // pred_check
      _
    $region15: #{tpu_custom_call.1} parent=1 // pred_check_branch
      %45 = sbr.rel (0) target = $region17
    $region16: #{tpu_custom_call.1} parent=1 // pred_region
      %47 = vsyncadd [#allocation6], 0
      %s48 = sshll.u32 %s3, 4
      %s49 = int_to_ptr.hbm [resolvable:$true] %s48
      %s50 = sshll.u32 [#allocation7], 4
      %s51 = int_to_ptr.vmem [resolvable:$true] %s50
      %56 = dma.hbm_to_vmem [thread:$0]  %s49, 1024, %s51, [#allocation6], 64, 64, 4
    $region17: #{tpu_custom_call.1} parent=1 // pred_fallthru
      _
    // Predicated region
    $region18: #{tpu_custom_call.1} parent=1 // pred_check
      _
    $region19: #{tpu_custom_call.1} parent=1 // pred_check_branch
      %58 = sbr.rel (0) target = $region21
    $region20: #{tpu_custom_call.1} parent=1 // pred_region
      _
    $region21: #{tpu_custom_call.1} parent=1 // pred_fallthru
      _
    // Predicated region
    $region22: #{tpu_custom_call.1} parent=1 // pred_check
      _
    $region23: #{tpu_custom_call.1} parent=1 // pred_check_branch
      %60 = sbr.rel (0) target = $region25
    $region24: #{tpu_custom_call.1} parent=1 // pred_region
      %62 = vsyncadd [#allocation9], 0
      %s63 = sshll.u32 %s5, 4
      %s64 = int_to_ptr.hbm [resolvable:$true] %s63
      %s65 = sshll.u32 [#allocation8], 4
      %s66 = int_to_ptr.vmem [resolvable:$true] %s65
      %71 = dma.hbm_to_vmem [thread:$0]  %s64, 1024, %s66, [#allocation9], 64, 64, 4
    $region25: #{tpu_custom_call.1} parent=1 // pred_fallthru
      _
    // Predicated region
    $region26: #{tpu_custom_call.1} parent=1 // pred_check
      _
    $region27: #{tpu_custom_call.1} parent=1 // pred_check_branch
      %73 = sbr.rel (0) target = $region29
    $region28: #{tpu_custom_call.1} parent=1 // pred_region
      _
    $region29: #{tpu_custom_call.1} parent=1 // pred_fallthru
      _
    // Predicated region
    $region30: #{tpu_custom_call.1} parent=1 // pred_check
      _
    $region31: #{tpu_custom_call.1} parent=1 // pred_check_branch
      %75 = sbr.rel (0) target = $region33
    $region32: #{tpu_custom_call.1} parent=1 // pred_region
      %77 = dma.done [#allocation3], 128
    $region33: #{tpu_custom_call.1} parent=1 // pred_fallthru
      _
    // Predicated region
    $region34: #{tpu_custom_call.1} parent=1 // pred_check
      _
    $region35: #{tpu_custom_call.1} parent=1 // pred_check_branch
      %79 = sbr.rel (0) target = $region37
    $region36: #{tpu_custom_call.1} parent=1 // pred_region
      %81 = dma.done [#allocation6], 1024
    $region37: #{tpu_custom_call.1} parent=1 // pred_fallthru
      _
    // Predicated region
    $region38: #{tpu_custom_call.1} parent=1 // pred_check
      _
    $region39: #{tpu_custom_call.1} parent=1 // pred_check_branch
      %83 = sbr.rel (0) target = $region41
    $region40: #{tpu_custom_call.1} parent=1 // pred_region
      %85 = dma.done [#allocation6], 1024
    $region41: #{tpu_custom_call.1} parent=1 // pred_fallthru
      _
    // Predicated region
    $region42: #{tpu_custom_call.1} parent=1 // pred_check
      _
    $region43: #{tpu_custom_call.1} parent=1 // pred_check_branch
      %87 = sbr.rel (0) target = $region45
    $region44: #{tpu_custom_call.1} parent=1 // pred_region
      %89 = dma.done [#allocation9], 1024
    $region45: #{tpu_custom_call.1} parent=1 // pred_fallthru
      _
    %v90 = vld [vmem:[#allocation2] sm:$0xf]
    %v91 = vld [vmem:[#allocation2 + $0x4] sm:$0xf]
    %v92 = vld [vmem:[#allocation5] sm:$0xf]
    %v93 = vld [vmem:[#allocation5 + $0x4] sm:$0xf]
    %v94 = vld [vmem:[#allocation5 + $0x8] sm:$0xf]
    %v95 = vld [vmem:[#allocation5 + $0xc] sm:$0xf]
    %v96 = vld [vmem:[#allocation5 + $0x10] sm:$0xf]
    %v97 = vld [vmem:[#allocation5 + $0x14] sm:$0xf]
    %v98 = vld [vmem:[#allocation5 + $0x18] sm:$0xf]
    %v99 = vld [vmem:[#allocation5 + $0x1c] sm:$0xf]
    %v100 = vld [vmem:[#allocation5 + $0x20] sm:$0xf]
    %v101 = vld [vmem:[#allocation5 + $0x24] sm:$0xf]
    %v102 = vld [vmem:[#allocation5 + $0x28] sm:$0xf]
    %v103 = vld [vmem:[#allocation5 + $0x2c] sm:$0xf]
    %v104 = vld [vmem:[#allocation5 + $0x30] sm:$0xf]
    %v105 = vld [vmem:[#allocation5 + $0x34] sm:$0xf]
    %v106 = vld [vmem:[#allocation5 + $0x38] sm:$0xf]
    %v107 = vld [vmem:[#allocation5 + $0x3c] sm:$0xf]
    %v108 = vld [vmem:[%s2] sm:$0x1]
    %v110 = vperm.slane %v108, 0
    %v114 = vunpack.c.l.b16 %v90
    %v115 = vunpack.c.l.b16 %v91
    %v116 = vpack.c.b16 %v115, %v114
    %v134 = vunpack.c.l.b16 %v92
    %v135 = vunpack.c.l.b16 %v93
    %v136 = vunpack.c.l.b16 %v94
    %v137 = vunpack.c.l.b16 %v95
    %v138 = vunpack.c.l.b16 %v96
    %v139 = vunpack.c.l.b16 %v97
    %v140 = vunpack.c.l.b16 %v98
    %v141 = vunpack.c.l.b16 %v99
    %v142 = vunpack.c.l.b16 %v100
    %v143 = vunpack.c.l.b16 %v101
    %v144 = vunpack.c.l.b16 %v102
    %v145 = vunpack.c.l.b16 %v103
    %v146 = vunpack.c.l.b16 %v104
    %v147 = vunpack.c.l.b16 %v105
    %v148 = vunpack.c.l.b16 %v106
    %v149 = vunpack.c.l.b16 %v107
    %v150 = vpack.c.b16 %v135, %v134
    %v151 = vpack.c.b16 %v137, %v136
    %v152 = vpack.c.b16 %v139, %v138
    %v153 = vpack.c.b16 %v141, %v140
    %v154 = vpack.c.b16 %v143, %v142
    %v155 = vpack.c.b16 %v145, %v144
    %v156 = vpack.c.b16 %v147, %v146
    %v157 = vpack.c.b16 %v149, %v148
    %166 = vmatpush.bf16.msra.mxu0 %v157
    %167 = vmatpush.bf16.msra.mxu0 %v156
    %168 = vmatpush.bf16.msra.mxu0 %v155
    %169 = vmatpush.bf16.msra.mxu0 %v154
    %170 = vmatpush.bf16.msra.mxu0 %v153
    %171 = vmatpush.bf16.msra.mxu0 %v152
    %172 = vmatpush.bf16.msra.mxu0 %v151
    %173 = vmatpush.bf16.msra.mxu0 %v150
    %174 = vmatmul.bf16.gmra.mxu0 %v116
    %v175 = vpop.f32.mrf.mxu0
    %v176 = vadd.f32 %v110, %v175
    %v177 = vpop.f32.mrf.mxu0
    %v178 = vadd.f32 %v110, %v177
    %179 = vdwg.mxu0
    %v180 = vmax.f32 %v176, 0.0
    %v181 = vmax.f32 %v178, 0.0
    %v182 = vld [vmem:[#allocation7] sm:$0xf]
    %v183 = vld [vmem:[#allocation7 + $0x4] sm:$0xf]
    %v184 = vld [vmem:[#allocation7 + $0x8] sm:$0xf]
    %v185 = vld [vmem:[#allocation7 + $0xc] sm:$0xf]
    %v186 = vld [vmem:[#allocation7 + $0x10] sm:$0xf]
    %v187 = vld [vmem:[#allocation7 + $0x14] sm:$0xf]
    %v188 = vld [vmem:[#allocation7 + $0x18] sm:$0xf]
    %v189 = vld [vmem:[#allocation7 + $0x1c] sm:$0xf]
    %v190 = vld [vmem:[#allocation7 + $0x20] sm:$0xf]
    %v191 = vld [vmem:[#allocation7 + $0x24] sm:$0xf]
    %v192 = vld [vmem:[#allocation7 + $0x28] sm:$0xf]
    %v193 = vld [vmem:[#allocation7 + $0x2c] sm:$0xf]
    %v194 = vld [vmem:[#allocation7 + $0x30] sm:$0xf]
    %v195 = vld [vmem:[#allocation7 + $0x34] sm:$0xf]
    %v196 = vld [vmem:[#allocation7 + $0x38] sm:$0xf]
    %v197 = vld [vmem:[#allocation7 + $0x3c] sm:$0xf]
    %v198 = vld [vmem:[%s4] sm:$0x1]
    %v199 = vpack.c.bf16 %v181, %v180
    %v201 = vperm.slane %v198, 0
    %v219 = vunpack.c.l.b16 %v182
    %v220 = vunpack.c.l.b16 %v183
    %v221 = vunpack.c.l.b16 %v184
    %v222 = vunpack.c.l.b16 %v185
    %v223 = vunpack.c.l.b16 %v186
    %v224 = vunpack.c.l.b16 %v187
    %v225 = vunpack.c.l.b16 %v188
    %v226 = vunpack.c.l.b16 %v189
    %v227 = vunpack.c.l.b16 %v190
    %v228 = vunpack.c.l.b16 %v191
    %v229 = vunpack.c.l.b16 %v192
    %v230 = vunpack.c.l.b16 %v193
    %v231 = vunpack.c.l.b16 %v194
    %v232 = vunpack.c.l.b16 %v195
    %v233 = vunpack.c.l.b16 %v196
    %v234 = vunpack.c.l.b16 %v197
    %v235 = vpack.c.b16 %v220, %v219
    %v236 = vpack.c.b16 %v222, %v221
    %v237 = vpack.c.b16 %v224, %v223
    %v238 = vpack.c.b16 %v226, %v225
    %v239 = vpack.c.b16 %v228, %v227
    %v240 = vpack.c.b16 %v230, %v229
    %v241 = vpack.c.b16 %v232, %v231
    %v242 = vpack.c.b16 %v234, %v233
    %251 = vmatpush.bf16.msra.mxu0 %v242
    %252 = vmatpush.bf16.msra.mxu0 %v241
    %253 = vmatpush.bf16.msra.mxu0 %v240
    %254 = vmatpush.bf16.msra.mxu0 %v239
    %255 = vmatpush.bf16.msra.mxu0 %v238
    %256 = vmatpush.bf16.msra.mxu0 %v237
    %257 = vmatpush.bf16.msra.mxu0 %v236
    %258 = vmatpush.bf16.msra.mxu0 %v235
    %259 = vmatmul.bf16.gmra.mxu0 %v199
    %v260 = vpop.f32.mrf.mxu0
    %v261 = vadd.f32 %v201, %v260
    %v262 = vpop.f32.mrf.mxu0
    %v263 = vadd.f32 %v201, %v262
    %264 = vdwg.mxu0
    %v265 = vmax.f32 %v261, 0.0
    %v266 = vmax.f32 %v263, 0.0
    %v267 = vld [vmem:[#allocation8] sm:$0xf]
    %v268 = vld [vmem:[#allocation8 + $0x4] sm:$0xf]
    %v269 = vld [vmem:[#allocation8 + $0x8] sm:$0xf]
    %v270 = vld [vmem:[#allocation8 + $0xc] sm:$0xf]
    %v271 = vld [vmem:[#allocation8 + $0x10] sm:$0xf]
    %v272 = vld [vmem:[#allocation8 + $0x14] sm:$0xf]
    %v273 = vld [vmem:[#allocation8 + $0x18] sm:$0xf]
    %v274 = vld [vmem:[#allocation8 + $0x1c] sm:$0xf]
    %v275 = vld [vmem:[#allocation8 + $0x20] sm:$0xf]
    %v276 = vld [vmem:[#allocation8 + $0x24] sm:$0xf]
    %v277 = vld [vmem:[#allocation8 + $0x28] sm:$0xf]
    %v278 = vld [vmem:[#allocation8 + $0x2c] sm:$0xf]
    %v279 = vld [vmem:[#allocation8 + $0x30] sm:$0xf]
    %v280 = vld [vmem:[#allocation8 + $0x34] sm:$0xf]
    %v281 = vld [vmem:[#allocation8 + $0x38] sm:$0xf]
    %v282 = vld [vmem:[#allocation8 + $0x3c] sm:$0xf]
    %v283 = vld [vmem:[%s6] sm:$0x1]
    %v284 = vpack.c.bf16 %v266, %v265
    %v286 = vperm.slane %v283, 0
    %v304 = vunpack.c.l.b16 %v267
    %v305 = vunpack.c.l.b16 %v268
    %v306 = vunpack.c.l.b16 %v269
    %v307 = vunpack.c.l.b16 %v270
    %v308 = vunpack.c.l.b16 %v271
    %v309 = vunpack.c.l.b16 %v272
    %v310 = vunpack.c.l.b16 %v273
    %v311 = vunpack.c.l.b16 %v274
    %v312 = vunpack.c.l.b16 %v275
    %v313 = vunpack.c.l.b16 %v276
    %v314 = vunpack.c.l.b16 %v277
    %v315 = vunpack.c.l.b16 %v278
    %v316 = vunpack.c.l.b16 %v279
    %v317 = vunpack.c.l.b16 %v280
    %v318 = vunpack.c.l.b16 %v281
    %v319 = vunpack.c.l.b16 %v282
    %v320 = vpack.c.b16 %v305, %v304
    %v321 = vpack.c.b16 %v307, %v306
    %v322 = vpack.c.b16 %v309, %v308
    %v323 = vpack.c.b16 %v311, %v310
    %v324 = vpack.c.b16 %v313, %v312
    %v325 = vpack.c.b16 %v315, %v314
    %v326 = vpack.c.b16 %v317, %v316
    %v327 = vpack.c.b16 %v319, %v318
    %336 = vmatpush.bf16.msra.mxu0 %v327
    %337 = vmatpush.bf16.msra.mxu0 %v326
    %338 = vmatpush.bf16.msra.mxu0 %v325
    %339 = vmatpush.bf16.msra.mxu0 %v324
    %340 = vmatpush.bf16.msra.mxu0 %v323
    %341 = vmatpush.bf16.msra.mxu0 %v322
    %342 = vmatpush.bf16.msra.mxu0 %v321
    %343 = vmatpush.bf16.msra.mxu0 %v320
    %344 = vmatmul.bf16.gmra.mxu0 %v284
    %v345 = vpop.f32.mrf.mxu0
    %v346 = vadd.f32 %v286, %v345
    %v347 = vpop.f32.mrf.mxu0
    %v348 = vadd.f32 %v286, %v347
    %349 = vdwg.mxu0
    %v350 = vmax.f32 %v346, 0.0
    %v351 = vmax.f32 %v348, 0.0
    %352 = vst [vmem:[#allocation10] sm:$0xff] %v350
    %353 = vst [vmem:[#allocation10 + $0x8] sm:$0xff] %v351
    // Predicated region
    $region46: #{tpu_custom_call.1} parent=1 // pred_check
      _
    $region47: #{tpu_custom_call.1} parent=1 // pred_check_branch
      %355 = sbr.rel (0) target = $region49
    $region48: #{tpu_custom_call.1} parent=1 // pred_region
      %357 = vsyncadd [#allocation4], 0
      %s358 = sshll.u32 [#allocation10], 4
      %s359 = int_to_ptr.vmem [resolvable:$true] %s358
      %s360 = sshll.u32 %s7, 4
      %s361 = int_to_ptr.hbm [resolvable:$true] %s360
      %366 = dma.vmem_to_hbm [thread:$0]  %s359, 256, %s361, [#allocation4], 128, 128, 8
    $region49: #{tpu_custom_call.1} parent=1 // pred_fallthru
      _
    // Predicated region
    $region50: #{tpu_custom_call.1} parent=1 // pred_check
      _
    $region51: #{tpu_custom_call.1} parent=1 // pred_check_branch
      %368 = sbr.rel (0) target = $region53
    $region52: #{tpu_custom_call.1} parent=1 // pred_region
      %370 = dma.done [#allocation4], 256
    $region53: #{tpu_custom_call.1} parent=1 // pred_fallthru
      _
    %371 = vsyncpa [#allocation3], 1
    %372 = vsyncpa [#allocation6], 1
    %373 = vsyncpa [#allocation9], 1
    %374 = vsyncpa [#allocation4], 1

// kernel: tpu_custom_call.1
$region0: #{tpu_custom_call.1}
  #allocation0 [shape = 'u32[]', space=smem, size = 0x4, offset = 0x4, fixed_abs, tag = 'smem constant byte address 0x4 - core index']
  #allocation1 [shape = 'u32[72,128]{1,0:T(1,128)}', space=vmem, size = 0x9000, scoped, tag = 'internal scratch']
  %s0 = inlined_call_operand.hbm [shape: bf16[16,128], index: 0, kind: input, shape index: {}]
  %s1 = inlined_call_operand.hbm [shape: bf16[128,128], index: 1, kind: input, shape index: {}]
  %s2 = inlined_call_operand.vmem [shape: f32[1,128], index: 2, kind: input, shape index: {}]
  %s3 = inlined_call_operand.hbm [shape: bf16[128,128], index: 3, kind: input, shape index: {}]
  %s4 = inlined_call_operand.vmem [shape: f32[1,128], index: 4, kind: input, shape index: {}]
  %s5 = inlined_call_operand.hbm [shape: bf16[128,128], index: 5, kind: input, shape index: {}]
  %s6 = inlined_call_operand.vmem [shape: f32[1,128], index: 6, kind: input, shape index: {}]
  %s7 = inlined_call_operand.hbm [shape: f32[16,128], index: 7, kind: output, shape index: {}]
  %s8 = sld [smem:[#allocation0]]
  $region54: #{tpu_custom_call.1} parent=0
    _
  %s10 = ssub.s32 1, %s8
  %s11 = scalar_select 0, %s10, %s8
  $region1: #{tpu_custom_call.1} parent=0
    #allocation2 [shape = 'u8[4096]{0}', space=vmem, size = 0x1000, scoped, tag = 'input window, operand 0, single buffered']
    #allocation3 [shape = 's32[1]{0}', space=sflag, size = 0x4, scoped, tag = 'scoped memory for tpu_custom_call.1']
    #allocation4 [shape = 's32[1]{0}', space=sflag, size = 0x4, scoped, tag = 'scoped memory for tpu_custom_call.1']
    #allocation5 [shape = 'u8[32768]{0}', space=vmem, size = 0x8000, scoped, tag = 'input window, operand 1, single buffered']
    #allocation6 [shape = 's32[1]{0}', space=sflag, size = 0x4, scoped, tag = 'scoped memory for tpu_custom_call.1']
    #allocation7 [shape = 'u8[32768]{0}', space=vmem, size = 0x8000, scoped, tag = 'input window, operand 3, single buffered']
    #allocation8 [shape = 'u8[32768]{0}', space=vmem, size = 0x8000, scoped, tag = 'input window, operand 5, single buffered']
    #allocation9 [shape = 's32[1]{0}', space=sflag, size = 0x4, scoped, tag = 'scoped memory for tpu_custom_call.1']
    #allocation10 [shape = 'u8[8192]{0}', space=vmem, size = 0x2000, scoped, tag = 'output window, operand 0, single buffered']
    %12 = vsyncpa [#allocation3], 0
    %13 = vsyncpa [#allocation6], 0
    %14 = vsyncpa [#allocation9], 0
    %15 = vsyncpa [#allocation4], 0
    // Predicated region
    $region2: #{tpu_custom_call.1} parent=1 // pred_check
      _
    $region3: #{tpu_custom_call.1} parent=1 // pred_check_branch
      %17 = sbr.rel (0) target = $region5
    $region4: #{tpu_custom_call.1} parent=1 // pred_region
      %19 = vsyncadd [#allocation3], 0
      %s20 = sshll.u32 %s0, 4
      %s21 = int_to_ptr.hbm [resolvable:$true] %s20
      %s22 = sshll.u32 [#allocation2], 4
      %s23 = int_to_ptr.vmem [resolvable:$true] %s22
      %28 = dma.hbm_to_vmem [thread:$0]  %s21, 128, %s23, [#allocation3], 64, 64, 4
    $region5: #{tpu_custom_call.1} parent=1 // pred_fallthru
      _
    // Predicated region
    $region6: #{tpu_custom_call.1} parent=1 // pred_check
      _
    $region7: #{tpu_custom_call.1} parent=1 // pred_check_branch
      %30 = sbr.rel (0) target = $region9
    $region8: #{tpu_custom_call.1} parent=1 // pred_region
      %32 = vsyncadd [#allocation6], 0
      %s33 = sshll.u32 %s1, 4
      %s34 = int_to_ptr.hbm [resolvable:$true] %s33
      %s35 = sshll.u32 [#allocation5], 4
      %s36 = int_to_ptr.vmem [resolvable:$true] %s35
      %41 = dma.hbm_to_vmem [thread:$0]  %s34, 1024, %s36, [#allocation6], 64, 64, 4
    $region9: #{tpu_custom_call.1} parent=1 // pred_fallthru
      _
    // Predicated region
    $region10: #{tpu_custom_call.1} parent=1 // pred_check
      _
    $region11: #{tpu_custom_call.1} parent=1 // pred_check_branch
      %43 = sbr.rel (0) target = $region13
    $region12: #{tpu_custom_call.1} parent=1 // pred_region
      _
    $region13: #{tpu_custom_call.1} parent=1 // pred_fallthru
      _
    // Predicated region
    $region14: #{tpu_custom_call.1} parent=1 // pred_check
      _
    $region15: #{tpu_custom_call.1} parent=1 // pred_check_branch
      %45 = sbr.rel (0) target = $region17
    $region16: #{tpu_custom_call.1} parent=1 // pred_region
      %47 = vsyncadd [#allocation6], 0
      %s48 = sshll.u32 %s3, 4
      %s49 = int_to_ptr.hbm [resolvable:$true] %s48
      %s50 = sshll.u32 [#allocation7], 4
      %s51 = int_to_ptr.vmem [resolvable:$true] %s50
      %56 = dma.hbm_to_vmem [thread:$0]  %s49, 1024, %s51, [#allocation6], 64, 64, 4
    $region17: #{tpu_custom_call.1} parent=1 // pred_fallthru
      _
    // Predicated region
    $region18: #{tpu_custom_call.1} parent=1 // pred_check
      _
    $region19: #{tpu_custom_call.1} parent=1 // pred_check_branch
      %58 = sbr.rel (0) target = $region21
    $region20: #{tpu_custom_call.1} parent=1 // pred_region
      _
    $region21: #{tpu_custom_call.1} parent=1 // pred_fallthru
      _
    // Predicated region
    $region22: #{tpu_custom_call.1} parent=1 // pred_check
      _
    $region23: #{tpu_custom_call.1} parent=1 // pred_check_branch
      %60 = sbr.rel (0) target = $region25
    $region24: #{tpu_custom_call.1} parent=1 // pred_region
      %62 = vsyncadd [#allocation9], 0
      %s63 = sshll.u32 %s5, 4
      %s64 = int_to_ptr.hbm [resolvable:$true] %s63
      %s65 = sshll.u32 [#allocation8], 4
      %s66 = int_to_ptr.vmem [resolvable:$true] %s65
      %71 = dma.hbm_to_vmem [thread:$0]  %s64, 1024, %s66, [#allocation9], 64, 64, 4
    $region25: #{tpu_custom_call.1} parent=1 // pred_fallthru
      _
    // Predicated region
    $region26: #{tpu_custom_call.1} parent=1 // pred_check
      _
    $region27: #{tpu_custom_call.1} parent=1 // pred_check_branch
      %73 = sbr.rel (0) target = $region29
    $region28: #{tpu_custom_call.1} parent=1 // pred_region
      _
    $region29: #{tpu_custom_call.1} parent=1 // pred_fallthru
      _
    // Predicated region
    $region30: #{tpu_custom_call.1} parent=1 // pred_check
      _
    $region31: #{tpu_custom_call.1} parent=1 // pred_check_branch
      %75 = sbr.rel (0) target = $region33
    $region32: #{tpu_custom_call.1} parent=1 // pred_region
      %77 = dma.done [#allocation3], 128
    $region33: #{tpu_custom_call.1} parent=1 // pred_fallthru
      _
    // Predicated region
    $region34: #{tpu_custom_call.1} parent=1 // pred_check
      _
    $region35: #{tpu_custom_call.1} parent=1 // pred_check_branch
      %79 = sbr.rel (0) target = $region37
    $region36: #{tpu_custom_call.1} parent=1 // pred_region
      %81 = dma.done [#allocation6], 1024
    $region37: #{tpu_custom_call.1} parent=1 // pred_fallthru
      _
    // Predicated region
    $region38: #{tpu_custom_call.1} parent=1 // pred_check
      _
    $region39: #{tpu_custom_call.1} parent=1 // pred_check_branch
      %83 = sbr.rel (0) target = $region41
    $region40: #{tpu_custom_call.1} parent=1 // pred_region
      %85 = dma.done [#allocation6], 1024
    $region41: #{tpu_custom_call.1} parent=1 // pred_fallthru
      _
    // Predicated region
    $region42: #{tpu_custom_call.1} parent=1 // pred_check
      _
    $region43: #{tpu_custom_call.1} parent=1 // pred_check_branch
      %87 = sbr.rel (0) target = $region45
    $region44: #{tpu_custom_call.1} parent=1 // pred_region
      %89 = dma.done [#allocation9], 1024
    $region45: #{tpu_custom_call.1} parent=1 // pred_fallthru
      _
    %v90 = vld [vmem:[#allocation2] sm:$0xf]
    %v91 = vld [vmem:[#allocation2 + $0x4] sm:$0xf]
    %v92 = vld [vmem:[#allocation5] sm:$0xf]
    %v93 = vld [vmem:[#allocation5 + $0x4] sm:$0xf]
    %v94 = vld [vmem:[#allocation5 + $0x8] sm:$0xf]
    %v95 = vld [vmem:[#allocation5 + $0xc] sm:$0xf]
    %v96 = vld [vmem:[#allocation5 + $0x10] sm:$0xf]
    %v97 = vld [vmem:[#allocation5 + $0x14] sm:$0xf]
    %v98 = vld [vmem:[#allocation5 + $0x18] sm:$0xf]
    %v99 = vld [vmem:[#allocation5 + $0x1c] sm:$0xf]
    %v100 = vld [vmem:[#allocation5 + $0x20] sm:$0xf]
    %v101 = vld [vmem:[#allocation5 + $0x24] sm:$0xf]
    %v102 = vld [vmem:[#allocation5 + $0x28] sm:$0xf]
    %v103 = vld [vmem:[#allocation5 + $0x2c] sm:$0xf]
    %v104 = vld [vmem:[#allocation5 + $0x30] sm:$0xf]
    %v105 = vld [vmem:[#allocation5 + $0x34] sm:$0xf]
    %v106 = vld [vmem:[#allocation5 + $0x38] sm:$0xf]
    %v107 = vld [vmem:[#allocation5 + $0x3c] sm:$0xf]
    %v108 = vld [vmem:[%s2] sm:$0x1]
    %v110 = vperm.slane %v108, 0
    %v114 = vunpack.c.l.b16 %v90
    %v115 = vunpack.c.l.b16 %v91
    %v116 = vpack.c.b16 %v115, %v114
    %v134 = vunpack.c.l.b16 %v92
    %v135 = vunpack.c.l.b16 %v93
    %v136 = vunpack.c.l.b16 %v94
    %v137 = vunpack.c.l.b16 %v95
    %v138 = vunpack.c.l.b16 %v96
    %v139 = vunpack.c.l.b16 %v97
    %v140 = vunpack.c.l.b16 %v98
    %v141 = vunpack.c.l.b16 %v99
    %v142 = vunpack.c.l.b16 %v100
    %v143 = vunpack.c.l.b16 %v101
    %v144 = vunpack.c.l.b16 %v102
    %v145 = vunpack.c.l.b16 %v103
    %v146 = vunpack.c.l.b16 %v104
    %v147 = vunpack.c.l.b16 %v105
    %v148 = vunpack.c.l.b16 %v106
    %v149 = vunpack.c.l.b16 %v107
    %v150 = vpack.c.b16 %v135, %v134
    %v151 = vpack.c.b16 %v137, %v136
    %v152 = vpack.c.b16 %v139, %v138
    %v153 = vpack.c.b16 %v141, %v140
    %v154 = vpack.c.b16 %v143, %v142
    %v155 = vpack.c.b16 %v145, %v144
    %v156 = vpack.c.b16 %v147, %v146
    %v157 = vpack.c.b16 %v149, %v148
    %166 = vmatpush.bf16.msra.mxu0 %v157
    %167 = vmatpush.bf16.msra.mxu0 %v156
    %168 = vmatpush.bf16.msra.mxu0 %v155
    %169 = vmatpush.bf16.msra.mxu0 %v154
    %170 = vmatpush.bf16.msra.mxu0 %v153
    %171 = vmatpush.bf16.msra.mxu0 %v152
    %172 = vmatpush.bf16.msra.mxu0 %v151
    %173 = vmatpush.bf16.msra.mxu0 %v150
    %174 = vmatmul.bf16.gmra.mxu0 %v116
    %v175 = vpop.f32.mrf.mxu0
    %v176 = vadd.f32 %v110, %v175
    %v177 = vpop.f32.mrf.mxu0
    %v178 = vadd.f32 %v110, %v177
    %179 = vdwg.mxu0
    %v180 = vmax.f32 %v176, 0.0
    %v181 = vmax.f32 %v178, 0.0
    %v182 = vld [vmem:[#allocation7] sm:$0xf]
    %v183 = vld [vmem:[#allocation7 + $0x4] sm:$0xf]
    %v184 = vld [vmem:[#allocation7 + $0x8] sm:$0xf]
    %v185 = vld [vmem:[#allocation7 + $0xc] sm:$0xf]
    %v186 = vld [vmem:[#allocation7 + $0x10] sm:$0xf]
    %v187 = vld [vmem:[#allocation7 + $0x14] sm:$0xf]
    %v188 = vld [vmem:[#allocation7 + $0x18] sm:$0xf]
    %v189 = vld [vmem:[#allocation7 + $0x1c] sm:$0xf]
    %v190 = vld [vmem:[#allocation7 + $0x20] sm:$0xf]
    %v191 = vld [vmem:[#allocation7 + $0x24] sm:$0xf]
    %v192 = vld [vmem:[#allocation7 + $0x28] sm:$0xf]
    %v193 = vld [vmem:[#allocation7 + $0x2c] sm:$0xf]
    %v194 = vld [vmem:[#allocation7 + $0x30] sm:$0xf]
    %v195 = vld [vmem:[#allocation7 + $0x34] sm:$0xf]
    %v196 = vld [vmem:[#allocation7 + $0x38] sm:$0xf]
    %v197 = vld [vmem:[#allocation7 + $0x3c] sm:$0xf]
    %v198 = vld [vmem:[%s4] sm:$0x1]
    %v199 = vpack.c.bf16 %v181, %v180
    %v201 = vperm.slane %v198, 0
    %v219 = vunpack.c.l.b16 %v182
    %v220 = vunpack.c.l.b16 %v183
    %v221 = vunpack.c.l.b16 %v184
    %v222 = vunpack.c.l.b16 %v185
    %v223 = vunpack.c.l.b16 %v186
    %v224 = vunpack.c.l.b16 %v187
    %v225 = vunpack.c.l.b16 %v188
    %v226 = vunpack.c.l.b16 %v189
    %v227 = vunpack.c.l.b16 %v190
    %v228 = vunpack.c.l.b16 %v191
    %v229 = vunpack.c.l.b16 %v192
    %v230 = vunpack.c.l.b16 %v193
    %v231 = vunpack.c.l.b16 %v194
    %v232 = vunpack.c.l.b16 %v195
    %v233 = vunpack.c.l.b16 %v196
    %v234 = vunpack.c.l.b16 %v197
    %v235 = vpack.c.b16 %v220, %v219
    %v236 = vpack.c.b16 %v222, %v221
    %v237 = vpack.c.b16 %v224, %v223
    %v238 = vpack.c.b16 %v226, %v225
    %v239 = vpack.c.b16 %v228, %v227
    %v240 = vpack.c.b16 %v230, %v229
    %v241 = vpack.c.b16 %v232, %v231
    %v242 = vpack.c.b16 %v234, %v233
    %251 = vmatpush.bf16.msra.mxu0 %v242
    %252 = vmatpush.bf16.msra.mxu0 %v241
    %253 = vmatpush.bf16.msra.mxu0 %v240
    %254 = vmatpush.bf16.msra.mxu0 %v239
    %255 = vmatpush.bf16.msra.mxu0 %v238
    %256 = vmatpush.bf16.msra.mxu0 %v237
    %257 = vmatpush.bf16.msra.mxu0 %v236
    %258 = vmatpush.bf16.msra.mxu0 %v235
    %259 = vmatmul.bf16.gmra.mxu0 %v199
    %v260 = vpop.f32.mrf.mxu0
    %v261 = vadd.f32 %v201, %v260
    %v262 = vpop.f32.mrf.mxu0
    %v263 = vadd.f32 %v201, %v262
    %264 = vdwg.mxu0
    %v265 = vmax.f32 %v261, 0.0
    %v266 = vmax.f32 %v263, 0.0
    %v267 = vld [vmem:[#allocation8] sm:$0xf]
    %v268 = vld [vmem:[#allocation8 + $0x4] sm:$0xf]
    %v269 = vld [vmem:[#allocation8 + $0x8] sm:$0xf]
    %v270 = vld [vmem:[#allocation8 + $0xc] sm:$0xf]
    %v271 = vld [vmem:[#allocation8 + $0x10] sm:$0xf]
    %v272 = vld [vmem:[#allocation8 + $0x14] sm:$0xf]
    %v273 = vld [vmem:[#allocation8 + $0x18] sm:$0xf]
    %v274 = vld [vmem:[#allocation8 + $0x1c] sm:$0xf]
    %v275 = vld [vmem:[#allocation8 + $0x20] sm:$0xf]
    %v276 = vld [vmem:[#allocation8 + $0x24] sm:$0xf]
    %v277 = vld [vmem:[#allocation8 + $0x28] sm:$0xf]
    %v278 = vld [vmem:[#allocation8 + $0x2c] sm:$0xf]
    %v279 = vld [vmem:[#allocation8 + $0x30] sm:$0xf]
    %v280 = vld [vmem:[#allocation8 + $0x34] sm:$0xf]
    %v281 = vld [vmem:[#allocation8 + $0x38] sm:$0xf]
    %v282 = vld [vmem:[#allocation8 + $0x3c] sm:$0xf]
    %v283 = vld [vmem:[%s6] sm:$0x1]
    %v284 = vpack.c.bf16 %v266, %v265
    %v286 = vperm.slane %v283, 0
    %v304 = vunpack.c.l.b16 %v267
    %v305 = vunpack.c.l.b16 %v268
    %v306 = vunpack.c.l.b16 %v269
    %v307 = vunpack.c.l.b16 %v270
    %v308 = vunpack.c.l.b16 %v271
    %v309 = vunpack.c.l.b16 %v272
    %v310 = vunpack.c.l.b16 %v273
    %v311 = vunpack.c.l.b16 %v274
    %v312 = vunpack.c.l.b16 %v275
    %v313 = vunpack.c.l.b16 %v276
    %v314 = vunpack.c.l.b16 %v277
    %v315 = vunpack.c.l.b16 %v278
    %v316 = vunpack.c.l.b16 %v279
    %v317 = vunpack.c.l.b16 %v280
    %v318 = vunpack.c.l.b16 %v281
    %v319 = vunpack.c.l.b16 %v282
    %v320 = vpack.c.b16 %v305, %v304
    %v321 = vpack.c.b16 %v307, %v306
    %v322 = vpack.c.b16 %v309, %v308
    %v323 = vpack.c.b16 %v311, %v310
    %v324 = vpack.c.b16 %v313, %v312
    %v325 = vpack.c.b16 %v315, %v314
    %v326 = vpack.c.b16 %v317, %v316
    %v327 = vpack.c.b16 %v319, %v318
    %336 = vmatpush.bf16.msra.mxu0 %v327
    %337 = vmatpush.bf16.msra.mxu0 %v326
    %338 = vmatpush.bf16.msra.mxu0 %v325
    %339 = vmatpush.bf16.msra.mxu0 %v324
    %340 = vmatpush.bf16.msra.mxu0 %v323
    %341 = vmatpush.bf16.msra.mxu0 %v322
    %342 = vmatpush.bf16.msra.mxu0 %v321
    %343 = vmatpush.bf16.msra.mxu0 %v320
    %344 = vmatmul.bf16.gmra.mxu0 %v284
    %v345 = vpop.f32.mrf.mxu0
    %v346 = vadd.f32 %v286, %v345
    %v347 = vpop.f32.mrf.mxu0
    %v348 = vadd.f32 %v286, %v347
    %349 = vdwg.mxu0
    %v350 = vmax.f32 %v346, 0.0
    %v351 = vmax.f32 %v348, 0.0
    %352 = vst [vmem:[#allocation10] sm:$0xff] %v350
    %353 = vst [vmem:[#allocation10 + $0x8] sm:$0xff] %v351
    // Predicated region
    $region46: #{tpu_custom_call.1} parent=1 // pred_check
      _
    $region47: #{tpu_custom_call.1} parent=1 // pred_check_branch
      %355 = sbr.rel (0) target = $region49
    $region48: #{tpu_custom_call.1} parent=1 // pred_region
      %357 = vsyncadd [#allocation4], 0
      %s358 = sshll.u32 [#allocation10], 4
      %s359 = int_to_ptr.vmem [resolvable:$true] %s358
      %s360 = sshll.u32 %s7, 4
      %s361 = int_to_ptr.hbm [resolvable:$true] %s360
      %366 = dma.vmem_to_hbm [thread:$0]  %s359, 256, %s361, [#allocation4], 128, 128, 8
    $region49: #{tpu_custom_call.1} parent=1 // pred_fallthru
      _
    // Predicated region
    $region50: #{tpu_custom_call.1} parent=1 // pred_check
      _
    $region51: #{tpu_custom_call.1} parent=1 // pred_check_branch
      %368 = sbr.rel (0) target = $region53
    $region52: #{tpu_custom_call.1} parent=1 // pred_region
      %370 = dma.done [#allocation4], 256
    $region53: #{tpu_custom_call.1} parent=1 // pred_fallthru
      _
    %371 = vsyncpa [#allocation3], 1
    %372 = vsyncpa [#allocation6], 1
    %373 = vsyncpa [#allocation9], 1
    %374 = vsyncpa [#allocation4], 1

</llo_original>
